<compile_context>
chip_gen: v7x
topology: tpu7x:2x2x1
jax: 0.10.0
libtpu: 0.0.40
codegen_flags: <defaults>
</compile_context>

<pallas_src>
import functools

import jax
import jax.numpy as jnp
from jax.experimental import pallas as pl
from jax.experimental.pallas import tpu as pltpu

IGNORE_LABEL = -1
_LANES = 128
_SUBLANES = 8


def _cdiv(a, b):
    return -(-a // b)


def _vmem_capacity_bytes():
    try:
        return int(pltpu.get_tpu_info().vmem_capacity_bytes)
    except Exception:
        return 64 << 20  # v7x per-core VMEM: the smallest of v5e/v6e/v7x


def _ce_fused_kernel(*refs, weights, ignore_label):
    """One grid step: weighted per-pixel CE for every head on (C, TILE_R, 128) blocks.

    refs = (x_ref_head0, ..., x_ref_headH-1, t_ref, sum_ref, cnt_ref,
            sum_acc, cnt_acc)
    Pixels fill the full (sublane, lane) plane; classes are the leading axis.
    """
    num_heads = len(weights)
    x_refs = refs[:num_heads]
    t_ref = refs[num_heads]
    sum_ref = refs[num_heads + 1]
    cnt_ref = refs[num_heads + 2]
    sum_acc = refs[num_heads + 3]
    cnt_acc = refs[num_heads + 4]

    i = pl.program_id(2)

    @pl.when(i == 0)
    def _():
        sum_acc[...] = jnp.zeros_like(sum_acc)
        cnt_acc[...] = jnp.zeros_like(cnt_acc)

    t = t_ref[...]                                    # (TILE_R, 128) int32
    # Target is padded with ignore_label to full grid coverage in the wrapper,
    # so this mask is exact (no ragged-tail / OOB masking needed).
    valid = t != ignore_label                         # (TILE_R, 128) bool
    cnt_acc[...] += valid.astype(jnp.float32)

    # One-hot machinery hoisted out of the per-head loop (JAX does not CSE
    # iota/broadcast, so per-head recomputation would cost a full VALU pass).
    num_classes = x_refs[0].shape[0]
    cls = jax.lax.broadcasted_iota(jnp.int32, (num_classes,) + t.shape, 0)
    onehot = cls == t[None, :, :]                     # (C, TILE_R, 128) bool

    step = jnp.zeros(t.shape, jnp.float32)
    for w, x_ref in zip(weights, x_refs):
        x = x_ref[...].astype(jnp.float32)            # (C, TILE_R, 128)
        # Class reduction over the LEADING axis: plain VPU max/add chains per
        # vreg (no XLU sublane trees); exp/log operate on dense (·, TILE_R, 128)
        # vregs so the EUP pipeline is fully packed.
        m = jnp.max(x, axis=0)                        # (TILE_R, 128)
        lse = m + jnp.log(jnp.sum(jnp.exp(x - m[None, :, :]), axis=0))
        picked = jnp.sum(jnp.where(onehot, x, 0.0), axis=0)
        step = step + jnp.float32(w) * (lse - picked)
    # Mask AFTER the weighted sum: NaN/garbage from clipped (out-of-bounds)
    # logits rows stays confined to lanes where valid == False.
    sum_acc[...] += jnp.where(valid, step, 0.0)

    # Final cross-lane reduce + tiny store: once per (batch, outer-chunk) only.
    @pl.when(i == pl.num_programs(2) - 1)
    def _():
        sum_ref[...] = jnp.sum(sum_acc[...]).reshape(1, 1, 1, 1)
        cnt_ref[...] = jnp.sum(cnt_acc[...]).reshape(1, 1, 1, 1)


def pallas_multi_head_cross_entropy(logits_list, target_nhw, weights,
                                    ignore_label=IGNORE_LABEL,
                                    compute_dtype=jnp.bfloat16,
                                    max_tile_rows=128):
    """sum_h weights[h] * nn.CrossEntropyLoss(ignore_index)(logits_list[h], target).

    All heads must already be at the target spatial resolution (N, C, H, W).
    Logits are fed NCHW-native ((N, C, HW/128, 128) free reshape) in
    `compute_dtype`; the class reduction runs in f32 inside the kernel.
    """
    assert len(weights) == len(logits_list)
    N, C, H, W = logits_list[0].shape
    for x in logits_list:
        assert x.shape == (N, C, H, W)
    assert target_nhw.shape == (N, H, W)
    HW = H * W
    num_heads = len(weights)
    itemsize = jnp.dtype(compute_dtype).itemsize

    # ---- logits: cast to compute dtype (bf16 halves the HBM reads), reshape to
    # (N, C, R, 128) so pixels fill whole (sublane, lane) vregs. The pad of the
    # last dim only materializes when HW is not already a multiple of 128.
    rows = _cdiv(HW, _LANES)
    xs = []
    for x in logits_list:
        if x.dtype != compute_dtype:
            x = x.astype(compute_dtype)
        x = x.reshape(N, C, HW)
        if HW != rows * _LANES:
            x = jnp.pad(x, ((0, 0), (0, 0), (0, rows * _LANES - HW)))
        xs.append(x.reshape(N, C, rows, _LANES))

    # ---- tile rows from a per-generation VMEM budget (double-buffered inputs
    # for every head + the in-kernel f32 temporaries), capped at 16K pixels.
    vmem_cap = _vmem_capacity_bytes()
    budget = vmem_cap // 3            # headroom for compiler temps / regalloc
    per_row = (2 * (num_heads * C * _LANES * itemsize + _LANES * 4)   # pipelined inputs
               + 4 * C * _LANES * 4 + 8 * _LANES * 4)                 # f32 in-kernel temps
    tile_rows = max(_SUBLANES, min(max_tile_rows, budget // per_row))
    tile_rows = (tile_rows // _SUBLANES) * _SUBLANES
    if rows <= tile_rows:
        tile_rows = rows              # full-extent block (legal even if not %8)
    num_tiles = _cdiv(rows, tile_rows)

    # ---- outer "parallel" pixel-chunk axis: lets v7x megacore split the work
    # even when N == 1. Only used when it divides the tile count exactly so no
    # grid step ever points at a fully out-of-bounds logits block.
    outer = 2 if (N == 1 and num_tiles >= 2 and num_tiles % 2 == 0) else 1
    inner = num_tiles // outer

    # ---- target: pad with ignore_label up to full grid coverage so every
    # tile's valid-mask is exact and all target reads are in-bounds.
    rows_padded = outer * inner * tile_rows
    t = target_nhw.reshape(N, HW).astype(jnp.int32)
    t = jnp.pad(t, ((0, 0), (0, rows_padded * _LANES - HW)),
                constant_values=ignore_label)
    t = t.reshape(N, rows_padded, _LANES)

    kernel = functools.partial(
        _ce_fused_kernel,
        weights=tuple(float(w) for w in weights),
        ignore_label=int(ignore_label))

    x_spec = pl.BlockSpec((pl.Squeezed(), C, tile_rows, _LANES),
                          lambda n, o, i: (n, 0, o * inner + i, 0))
    t_spec = pl.BlockSpec((pl.Squeezed(), tile_rows, _LANES),
                          lambda n, o, i: (n, o * inner + i, 0))
    out_spec = pl.BlockSpec((1, 1, 1, 1), lambda n, o, i: (n, o, 0, 0))

    vmem_need = (tile_rows * per_row                   # pipelined inputs + temps
                 + 2 * tile_rows * _LANES * 4          # scratch accumulators
                 + (2 << 20))
    vmem_limit = int(min(vmem_cap, max(2 * vmem_need, 48 << 20)))

    out_sum, out_cnt = pl.pallas_call(
        kernel,
        out_shape=(jax.ShapeDtypeStruct((N, outer, 1, 1), jnp.float32),
                   jax.ShapeDtypeStruct((N, outer, 1, 1), jnp.float32)),
        grid_spec=pltpu.PrefetchScalarGridSpec(
            num_scalar_prefetch=0,
            grid=(N, outer, inner),
            in_specs=[x_spec] * num_heads + [t_spec],
            out_specs=(out_spec, out_spec),
            scratch_shapes=[pltpu.VMEM((tile_rows, _LANES), jnp.float32),
                            pltpu.VMEM((tile_rows, _LANES), jnp.float32)]),
        compiler_params=pltpu.CompilerParams(
            dimension_semantics=("parallel", "parallel", "arbitrary"),
            vmem_limit_bytes=vmem_limit),
    )(*xs, t)

    # Per-(batch, chunk) partial sums/counts -> final scalar reduce in JAX.
    # NOTE: if every pixel is ignore_label, this divides by 0 and returns
    # NaN/inf -- same behavior as PyTorch's CrossEntropyLoss(mean).
    return jnp.sum(out_sum) / jnp.sum(out_cnt)


def cross_entropy_forward(scores, target, ignore_label=IGNORE_LABEL,
                          align_corners=False, compute_dtype=jnp.bfloat16):
    """Equivalent of CrossEntropy.forward: 0.4 * loss(scores[0]) + 1.0 * loss(scores[1])."""
    weights = [0.4, 1.0]
    assert len(weights) == len(scores)
    if align_corners:
        # TODO(synk): align_corners=True resize variant not implemented.
        raise NotImplementedError("align_corners=True is not supported")
    h, w = target.shape[1], target.shape[2]
    resized = []
    for s in scores:
        if s.shape[2] != h or s.shape[3] != w:
            # PyTorch F.interpolate(mode='bilinear', align_corners=False) ==
            # half-pixel-center bilinear resize. Done in the compute dtype so
            # the materialized full-res aux logits are half-width in HBM.
            # TODO(synk): fuse this upsample into the CE kernel (halo BlockSpec
            # over low-res rows) to avoid materializing full-res aux logits.
            s = jax.image.resize(s.astype(compute_dtype),
                                 (s.shape[0], s.shape[1], h, w),
                                 method="bilinear")
        resized.append(s)
    return pallas_multi_head_cross_entropy(
        resized, target, weights,
        ignore_label=ignore_label, compute_dtype=compute_dtype)


# ---------------- pure-JAX reference (for verification) ----------------
def _ref_ce(logits_nchw, target_nhw, ignore_label=IGNORE_LABEL):
    N, C, H, W = logits_nchw.shape
    x = jnp.transpose(logits_nchw, (0, 2, 3, 1)).reshape(-1, C).astype(jnp.float32)
    t = target_nhw.reshape(-1).astype(jnp.int32)
    lse = jax.scipy.special.logsumexp(x, axis=-1)
    picked = jnp.take_along_axis(x, jnp.clip(t, 0, C - 1)[:, None], axis=-1)[:, 0]
    valid = t != ignore_label
    per = jnp.where(valid, lse - picked, 0.0)
    return jnp.sum(per) / jnp.sum(valid.astype(jnp.float32))


def _ref_forward(scores, target, ignore_label=IGNORE_LABEL):
    weights = [0.4, 1.0]
    h, w = target.shape[1], target.shape[2]
    total = jnp.float32(0.0)
    for wgt, s in zip(weights, scores):
        if s.shape[2] != h or s.shape[3] != w:
            s = jax.image.resize(s, (s.shape[0], s.shape[1], h, w),
                                 method="bilinear")
        total = total + wgt * _ref_ce(s, target, ignore_label)
    return total


if __name__ == "__main__":
    key = jax.random.PRNGKey(0)

    def make_case(case_key, n, c, h, w, ignore_frac=0.1):
        k0, k1, k2, k3 = jax.random.split(case_key, 4)
        # Two heads: aux head at half resolution (bilinearly upsampled), main full res.
        score_aux = jax.random.normal(k0, (n, c, h // 2, w // 2), dtype=jnp.float32)
        score_main = jax.random.normal(k1, (n, c, h, w), dtype=jnp.float32)
        tgt = jax.random.randint(k2, (n, h, w), 0, c, dtype=jnp.int32)
        tgt = jnp.where(jax.random.uniform(k3, (n, h, w)) < ignore_frac,
                        IGNORE_LABEL, tgt)
        return [score_aux, score_main], tgt

    k_a, k_b = jax.random.split(key)
    cases = [
        make_case(k_a, 2, 8, 16, 16),      # tiny: single row-tile per image
        make_case(k_b, 1, 5, 136, 136),    # multi-tile + ragged rows + N=1 outer split
    ]

    fwd_f32 = jax.jit(functools.partial(cross_entropy_forward,
                                        compute_dtype=jnp.float32))
    fwd_bf16 = jax.jit(functools.partial(cross_entropy_forward,
                                         compute_dtype=jnp.bfloat16))

    for scores, target in cases:
        ref = jax.block_until_ready(_ref_forward(scores, target))

        out_f32 = jax.block_until_ready(fwd_f32(scores, target))
        assert jnp.allclose(out_f32, ref, rtol=1e-4, atol=1e-4), (out_f32, ref)

        out_bf16 = jax.block_until_ready(fwd_bf16(scores, target))
        assert jnp.allclose(out_bf16, ref, rtol=2e-2, atol=5e-2), (out_bf16, ref)

    print("KERNEL_OK")
</pallas_src>

<mosaic_0001>
module attributes {stable_mosaic.version = 11 : i64} {
  func.func @_ce_fused_kernel(%arg0: i32, %arg1: i32, %arg2: i32, %arg3: memref<1x8x2x128xf32, #tpu.memory_space<vmem>>, %arg4: memref<1x8x2x128xf32, #tpu.memory_space<vmem>>, %arg5: memref<1x2x128xi32, #tpu.memory_space<vmem>>, %arg6: memref<1x1x1x1xf32, #tpu.memory_space<vmem>>, %arg7: memref<1x1x1x1xf32, #tpu.memory_space<vmem>>, %arg8: memref<2x128xf32, #tpu.memory_space<vmem>>, %arg9: memref<2x128xf32, #tpu.memory_space<vmem>>) attributes {dimension_semantics = [#tpu.dimension_semantics<parallel>, #tpu.dimension_semantics<parallel>, #tpu.dimension_semantics<arbitrary>], iteration_bounds = array<i64: 2, 1, 1>, scalar_prefetch = 0 : i64, scratch_operands = 2 : i64, tpu.core_type = #tpu.core_type<tc>, window_params = [{transform_indices = @transform_0, window_bounds = array<i64: 1, 8, 2, 128>}, {transform_indices = @transform_1, window_bounds = array<i64: 1, 8, 2, 128>}, {transform_indices = @transform_2, window_bounds = array<i64: 1, 2, 128>}, {transform_indices = @transform_3, window_bounds = array<i64: 1, 1, 1, 1>}, {transform_indices = @transform_4, window_bounds = array<i64: 1, 1, 1, 1>}]} {
    %c0_i32 = arith.constant 0 : i32
    %0 = arith.cmpi eq, %arg2, %c0_i32 : i32
    %1 = arith.extui %0 : i1 to i32
    %c0_i32_0 = arith.constant 0 : i32
    %2 = arith.cmpi ne, %1, %c0_i32_0 : i32
    scf.if %2 {
      %cst_32 = arith.constant 0.000000e+00 : f32
      %59 = vector.broadcast %cst_32 : f32 to vector<2x128xf32>
      %c0_33 = arith.constant 0 : index
      %c0_34 = arith.constant 0 : index
      %60 = vector.load %arg8[%c0_33, %c0_34] : memref<2x128xf32, #tpu.memory_space<vmem>>, vector<2x128xf32>
      tpu.vector_store %arg8[%c0_33, %c0_34], %59 {strides = array<i32>} : memref<2x128xf32, #tpu.memory_space<vmem>>, vector<2x128xf32>,
      %cst_35 = arith.constant 0.000000e+00 : f32
      %61 = vector.broadcast %cst_35 : f32 to vector<2x128xf32>
      %c0_36 = arith.constant 0 : index
      %c0_37 = arith.constant 0 : index
      %62 = vector.load %arg9[%c0_36, %c0_37] : memref<2x128xf32, #tpu.memory_space<vmem>>, vector<2x128xf32>
      tpu.vector_store %arg9[%c0_36, %c0_37], %61 {strides = array<i32>} : memref<2x128xf32, #tpu.memory_space<vmem>>, vector<2x128xf32>,
    } else {
    }
    %c0 = arith.constant 0 : index
    %c0_1 = arith.constant 0 : index
    %c0_2 = arith.constant 0 : index
    %3 = vector.load %arg5[%c0, %c0_1, %c0_2] : memref<1x2x128xi32, #tpu.memory_space<vmem>>, vector<1x2x128xi32>
    %4 = vector.shape_cast %3 : vector<1x2x128xi32> to vector<2x128xi32>
    %c-1_i32 = arith.constant -1 : i32
    %5 = vector.broadcast %c-1_i32 : i32 to vector<2x128xi32>
    %6 = arith.cmpi ne, %4, %5 : vector<2x128xi32>
    %c0_3 = arith.constant 0 : index
    %c0_4 = arith.constant 0 : index
    %7 = vector.load %arg9[%c0_3, %c0_4] : memref<2x128xf32, #tpu.memory_space<vmem>>, vector<2x128xf32>
    %8 = arith.extui %6 : vector<2x128xi1> to vector<2x128xi32>
    %9 = arith.sitofp %8 : vector<2x128xi32> to vector<2x128xf32>
    %10 = arith.addf %7, %9 : vector<2x128xf32>
    %c0_5 = arith.constant 0 : index
    %c0_6 = arith.constant 0 : index
    %11 = vector.load %arg9[%c0_5, %c0_6] : memref<2x128xf32, #tpu.memory_space<vmem>>, vector<2x128xf32>
    tpu.vector_store %arg9[%c0_5, %c0_6], %10 {strides = array<i32>} : memref<2x128xf32, #tpu.memory_space<vmem>>, vector<2x128xf32>,
    %12 = tpu.iota {dimensions = array<i32: 0>} : vector<8x2x128xi32>
    %13 = vector.shape_cast %4 : vector<2x128xi32> to vector<1x2x128xi32>
    %14 = vector.broadcast %13 : vector<1x2x128xi32> to vector<8x2x128xi32>
    %15 = arith.cmpi eq, %12, %14 : vector<8x2x128xi32>
    %cst = arith.constant 0.000000e+00 : f32
    %16 = vector.broadcast %cst : f32 to vector<2x128xf32>
    %c0_7 = arith.constant 0 : index
    %c0_8 = arith.constant 0 : index
    %c0_9 = arith.constant 0 : index
    %c0_10 = arith.constant 0 : index
    %17 = vector.load %arg3[%c0_7, %c0_8, %c0_9, %c0_10] : memref<1x8x2x128xf32, #tpu.memory_space<vmem>>, vector<1x8x2x128xf32>
    %18 = vector.shape_cast %17 : vector<1x8x2x128xf32> to vector<8x2x128xf32>
    %cst_11 = arith.constant dense<0xFF800000> : vector<2x128xf32>
    %19 = vector.multi_reduction <maximumf>, %18, %cst_11 [0] : vector<8x2x128xf32> to vector<2x128xf32>
    %20 = vector.shape_cast %19 : vector<2x128xf32> to vector<1x2x128xf32>
    %21 = vector.broadcast %20 : vector<1x2x128xf32> to vector<8x2x128xf32>
    %22 = arith.subf %18, %21 : vector<8x2x128xf32>
    %23 = math.exp %22 : vector<8x2x128xf32>
    %cst_12 = arith.constant dense<0.000000e+00> : vector<2x128xf32>
    %24 = vector.multi_reduction <add>, %23, %cst_12 [0] : vector<8x2x128xf32> to vector<2x128xf32>
    %25 = math.log %24 : vector<2x128xf32>
    %26 = arith.addf %19, %25 : vector<2x128xf32>
    %cst_13 = arith.constant 0.000000e+00 : f32
    %27 = vector.broadcast %cst_13 : f32 to vector<8x2x128xf32>
    %28 = arith.select %15, %18, %27 : vector<8x2x128xi1>, vector<8x2x128xf32>
    %cst_14 = arith.constant dense<0.000000e+00> : vector<2x128xf32>
    %29 = vector.multi_reduction <add>, %28, %cst_14 [0] : vector<8x2x128xf32> to vector<2x128xf32>
    %30 = arith.subf %26, %29 : vector<2x128xf32>
    %cst_15 = arith.constant 4.000000e-01 : f32
    %31 = vector.broadcast %cst_15 : f32 to vector<2x128xf32>
    %32 = arith.mulf %31, %30 : vector<2x128xf32>
    %33 = arith.addf %16, %32 : vector<2x128xf32>
    %c0_16 = arith.constant 0 : index
    %c0_17 = arith.constant 0 : index
    %c0_18 = arith.constant 0 : index
    %c0_19 = arith.constant 0 : index
    %34 = vector.load %arg4[%c0_16, %c0_17, %c0_18, %c0_19] : memref<1x8x2x128xf32, #tpu.memory_space<vmem>>, vector<1x8x2x128xf32>
    %35 = vector.shape_cast %34 : vector<1x8x2x128xf32> to vector<8x2x128xf32>
    %cst_20 = arith.constant dense<0xFF800000> : vector<2x128xf32>
    %36 = vector.multi_reduction <maximumf>, %35, %cst_20 [0] : vector<8x2x128xf32> to vector<2x128xf32>
    %37 = vector.shape_cast %36 : vector<2x128xf32> to vector<1x2x128xf32>
    %38 = vector.broadcast %37 : vector<1x2x128xf32> to vector<8x2x128xf32>
    %39 = arith.subf %35, %38 : vector<8x2x128xf32>
    %40 = math.exp %39 : vector<8x2x128xf32>
    %cst_21 = arith.constant dense<0.000000e+00> : vector<2x128xf32>
    %41 = vector.multi_reduction <add>, %40, %cst_21 [0] : vector<8x2x128xf32> to vector<2x128xf32>
    %42 = math.log %41 : vector<2x128xf32>
    %43 = arith.addf %36, %42 : vector<2x128xf32>
    %cst_22 = arith.constant 0.000000e+00 : f32
    %44 = vector.broadcast %cst_22 : f32 to vector<8x2x128xf32>
    %45 = arith.select %15, %35, %44 : vector<8x2x128xi1>, vector<8x2x128xf32>
    %cst_23 = arith.constant dense<0.000000e+00> : vector<2x128xf32>
    %46 = vector.multi_reduction <add>, %45, %cst_23 [0] : vector<8x2x128xf32> to vector<2x128xf32>
    %47 = arith.subf %43, %46 : vector<2x128xf32>
    %cst_24 = arith.constant 1.000000e+00 : f32
    %48 = vector.broadcast %cst_24 : f32 to vector<2x128xf32>
    %49 = arith.mulf %48, %47 : vector<2x128xf32>
    %50 = arith.addf %33, %49 : vector<2x128xf32>
    %c0_25 = arith.constant 0 : index
    %c0_26 = arith.constant 0 : index
    %51 = vector.load %arg8[%c0_25, %c0_26] : memref<2x128xf32, #tpu.memory_space<vmem>>, vector<2x128xf32>
    %cst_27 = arith.constant 0.000000e+00 : f32
    %52 = vector.broadcast %cst_27 : f32 to vector<2x128xf32>
    %53 = arith.select %6, %50, %52 : vector<2x128xi1>, vector<2x128xf32>
    %54 = arith.addf %51, %53 : vector<2x128xf32>
    %c0_28 = arith.constant 0 : index
    %c0_29 = arith.constant 0 : index
    %55 = vector.load %arg8[%c0_28, %c0_29] : memref<2x128xf32, #tpu.memory_space<vmem>>, vector<2x128xf32>
    tpu.vector_store %arg8[%c0_28, %c0_29], %54 {strides = array<i32>} : memref<2x128xf32, #tpu.memory_space<vmem>>, vector<2x128xf32>,
    %c0_i32_30 = arith.constant 0 : i32
    %56 = arith.cmpi eq, %arg2, %c0_i32_30 : i32
    %57 = arith.extui %56 : i1 to i32
    %c0_i32_31 = arith.constant 0 : i32
    %58 = arith.cmpi ne, %57, %c0_i32_31 : i32
    scf.if %58 {
      %c0_32 = arith.constant 0 : index
      %c0_33 = arith.constant 0 : index
      %59 = vector.load %arg8[%c0_32, %c0_33] : memref<2x128xf32, #tpu.memory_space<vmem>>, vector<2x128xf32>
      %60 = vector.shape_cast %59 : vector<2x128xf32> to vector<1x2x128xf32>
      %cst_34 = arith.constant dense<0.000000e+00> : vector<1xf32>
      %61 = vector.multi_reduction <add>, %60, %cst_34 [1, 2] : vector<1x2x128xf32> to vector<1xf32>
      %62 = vector.shape_cast %61 : vector<1xf32> to vector<1x1x1xf32>
      %63 = vector.extract %62[0, 0, 0] : f32 from vector<1x1x1xf32>
      %64 = vector.broadcast %63 : f32 to vector<1x1x1x1xf32>
      %c0_35 = arith.constant 0 : index
      %c0_36 = arith.constant 0 : index
      %c0_37 = arith.constant 0 : index
      %c0_38 = arith.constant 0 : index
      %65 = vector.load %arg6[%c0_35, %c0_36, %c0_37, %c0_38] : memref<1x1x1x1xf32, #tpu.memory_space<vmem>>, vector<1x1x1x1xf32>
      tpu.vector_store %arg6[%c0_35, %c0_36, %c0_37, %c0_38], %64 {strides = array<i32>} : memref<1x1x1x1xf32, #tpu.memory_space<vmem>>, vector<1x1x1x1xf32>,
      %c0_39 = arith.constant 0 : index
      %c0_40 = arith.constant 0 : index
      %66 = vector.load %arg9[%c0_39, %c0_40] : memref<2x128xf32, #tpu.memory_space<vmem>>, vector<2x128xf32>
      %67 = vector.shape_cast %66 : vector<2x128xf32> to vector<1x2x128xf32>
      %cst_41 = arith.constant dense<0.000000e+00> : vector<1xf32>
      %68 = vector.multi_reduction <add>, %67, %cst_41 [1, 2] : vector<1x2x128xf32> to vector<1xf32>
      %69 = vector.shape_cast %68 : vector<1xf32> to vector<1x1x1xf32>
      %70 = vector.extract %69[0, 0, 0] : f32 from vector<1x1x1xf32>
      %71 = vector.broadcast %70 : f32 to vector<1x1x1x1xf32>
      %c0_42 = arith.constant 0 : index
      %c0_43 = arith.constant 0 : index
      %c0_44 = arith.constant 0 : index
      %c0_45 = arith.constant 0 : index
      %72 = vector.load %arg7[%c0_42, %c0_43, %c0_44, %c0_45] : memref<1x1x1x1xf32, #tpu.memory_space<vmem>>, vector<1x1x1x1xf32>
      tpu.vector_store %arg7[%c0_42, %c0_43, %c0_44, %c0_45], %71 {strides = array<i32>} : memref<1x1x1x1xf32, #tpu.memory_space<vmem>>, vector<1x1x1x1xf32>,
    } else {
    }
    return
  }
  func.func @transform_0(%arg0: i32, %arg1: i32, %arg2: i32) -> (i32, i32, i32, i32) {
    %c1_i32 = arith.constant 1 : i32
    %0 = arith.muli %arg1, %c1_i32 : i32
    %1 = arith.addi %0, %arg2 : i32
    %c0_i32 = arith.constant 0 : i32
    %c0_i32_0 = arith.constant 0 : i32
    %c0_i32_1 = arith.constant 0 : i32
    return %arg0, %c0_i32, %1, %c0_i32_0 : i32, i32, i32, i32
  }
  func.func @transform_1(%arg0: i32, %arg1: i32, %arg2: i32) -> (i32, i32, i32, i32) {
    %c1_i32 = arith.constant 1 : i32
    %0 = arith.muli %arg1, %c1_i32 : i32
    %1 = arith.addi %0, %arg2 : i32
    %c0_i32 = arith.constant 0 : i32
    %c0_i32_0 = arith.constant 0 : i32
    %c0_i32_1 = arith.constant 0 : i32
    return %arg0, %c0_i32, %1, %c0_i32_0 : i32, i32, i32, i32
  }
  func.func @transform_2(%arg0: i32, %arg1: i32, %arg2: i32) -> (i32, i32, i32) {
    %c1_i32 = arith.constant 1 : i32
    %0 = arith.muli %arg1, %c1_i32 : i32
    %1 = arith.addi %0, %arg2 : i32
    %c0_i32 = arith.constant 0 : i32
    %c0_i32_0 = arith.constant 0 : i32
    return %arg0, %1, %c0_i32 : i32, i32, i32
  }
  func.func @transform_3(%arg0: i32, %arg1: i32, %arg2: i32) -> (i32, i32, i32, i32) {
    %c0_i32 = arith.constant 0 : i32
    %c0_i32_0 = arith.constant 0 : i32
    %c0_i32_1 = arith.constant 0 : i32
    return %arg0, %arg1, %c0_i32, %c0_i32_0 : i32, i32, i32, i32
  }
  func.func @transform_4(%arg0: i32, %arg1: i32, %arg2: i32) -> (i32, i32, i32, i32) {
    %c0_i32 = arith.constant 0 : i32
    %c0_i32_0 = arith.constant 0 : i32
    %c0_i32_1 = arith.constant 0 : i32
    return %arg0, %arg1, %c0_i32, %c0_i32_0 : i32, i32, i32, i32
  }
}

</mosaic_0001>

<llo_original>
// kernel: cross_entropy_forward.1
$region0: #{cross_entropy_forward.1}
  #allocation0 [shape = 'u32[]', space=smem, size = 0x4, offset = 0x4, fixed_abs, tag = 'smem constant byte address 0x4 - core index']
  #allocation1 [shape = 'u32[144,128]{1,0:T(1,128)}', space=vmem, size = 0x12000, scoped, tag = 'internal scratch']
  #allocation2 [shape = 'f32[2,128]{1,0:T(2,128)}', space=vmem, size = 0x400, scoped, tag = 'scratch operand']
  #allocation3 [shape = 'f32[2,128]{1,0:T(2,128)}', space=vmem, size = 0x400, scoped, tag = 'scratch operand']
  %s0 = inlined_call_operand.vmem [shape: f32[2,8,2,128], index: 0, kind: input, shape index: {}]
  %s1 = inlined_call_operand.vmem [shape: f32[2,8,2,128], index: 1, kind: input, shape index: {}]
  %s2 = inlined_call_operand.vmem [shape: s32[2,2,128], index: 2, kind: input, shape index: {}]
  %s3 = inlined_call_operand.vmem [shape: f32[2,1,1,1], index: 3, kind: output, shape index: {0}]
  %s4 = inlined_call_operand.vmem [shape: f32[2,1,1,1], index: 4, kind: output, shape index: {1}]
  %5 = xla_tuple %s3, %s4
  %s6 = sld [smem:[#allocation0]]
  $region61: #{cross_entropy_forward.1} parent=0
    _
  %s8 = ssub.s32 1, %s6
  %s9 = scalar_select 0, %s8, %s6
  loop: start=0, step=1, limit=4
  $region2: #{cross_entropy_forward.1} parent=0 // loop_pre_header
    _
  $region3: #{cross_entropy_forward.1} parent=0 // loop_header
    %s11 = sphi 0, %s15
    %p12 = scmp.ge.s32.totalorder %s11, 4
    %s18 = sphi 0, %s37
    %s19 = sphi 0, %s33
    %s20 = sphi 0, %s29
    %s21 = sphi 0, %s18
    %s22 = sphi 0, %s19
    %s23 = sphi 0, %s20
    %s24 = sphi 0, %s21
    %s25 = sphi 0, %s22
    %s26 = sphi 0, %s23
    %s44 = sphi 0, %s46
    %s47 = sphi 0, %s44
    %s48 = sphi 0, %s47
    %s64 = sphi 0, %s48
    %s74 = sphi 0, %s76
    %s77 = sphi 0, %s74
    %s78 = sphi 0, %s77
    %s94 = sphi 0, %s78
    %s104 = sphi 0, %s106
    %s107 = sphi 0, %s104
    %s108 = sphi 0, %s107
    %s124 = sphi 0, %s108
    %s132 = sphi 0, %s134
    %s135 = sphi 0, %s132
    %s136 = sphi 0, %s135
    %s152 = sphi 0, %s136
    %s160 = sphi 0, %s162
    %s163 = sphi 0, %s160
    %s164 = sphi 0, %s163
    %s180 = sphi 0, %s164
  $region4: #{cross_entropy_forward.1} parent=0 // loop_header_branch
    %14 = sbr.rel (%p12) target = $region8
  $region5: #{cross_entropy_forward.1} parent=0 // loop_body
    %s16 = ssub.s32 %s11, 1
    %s17 = ssub.s32 %s11, 2
    %s27 = sadd.s32 1, %s20
    %p28 = scmp.ge.s32.totalorder %s27, 1
    %s29 = scalar_select %p28, 0, %s27
    %s30 = sadd.s32 1, %s19
    %s31 = scalar_select %p28, %s30, %s19
    %p32 = scmp.ge.s32.totalorder %s31, 1
    %s33 = scalar_select %p32, 0, %s31
    %s34 = sadd.s32 1, %s18
    %s35 = scalar_select %p32, %s34, %s18
    %p36 = scmp.ge.s32.totalorder %s35, 2
    %s37 = scalar_select %p36, 0, %s35
    %s38 = sadd.s32 %s19, %s20
    %s39 = sadd.s32 %s33, %s29
    %s40 = ssub.s32 %s18, %s37
    %s41 = ssub.s32 %s38, %s39
    %s42 = sor.u32 %s40, %s41
    %p43 = scmp.eq.s32.totalorder %s42, 0
    %s45 = sadd.s32 %s44, 1
    %s46 = scalar_select %p43, %s44, %s45
    %p49 = pneg %p43
    %p50 = scmp.eq.s32.totalorder %s11, 1
    %p51 = por %p49, %p50
    %p52 = scmp.ne.s32.totalorder %s44, %s47
    %p53 = scmp.eq.s32.totalorder %s11, 0
    %p54 = por %p52, %p53
    %p55 = scmp.ne.s32.totalorder %s44, %s47
    %p56 = scmp.eq.s32.totalorder %s16, 1
    %p57 = por %p55, %p56
    %p58 = scmp.ne.s32.totalorder %s47, %s48
    %p59 = scmp.eq.s32.totalorder %s16, 0
    %p60 = por %p58, %p59
    %p61 = scmp.ne.s32.totalorder %s47, %s48
    %p62 = scmp.eq.s32.totalorder %s17, 1
    %p63 = por %p61, %p62
    %p65 = scmp.ne.s32.totalorder %s48, %s64
    %p66 = scmp.eq.s32.totalorder %s17, 0
    %p67 = por %p65, %p66
    %s68 = sadd.s32 %s19, %s20
    %s69 = sadd.s32 %s33, %s29
    %s70 = ssub.s32 %s18, %s37
    %s71 = ssub.s32 %s68, %s69
    %s72 = sor.u32 %s70, %s71
    %p73 = scmp.eq.s32.totalorder %s72, 0
    %s75 = sadd.s32 %s74, 1
    %s76 = scalar_select %p73, %s74, %s75
    %p79 = pneg %p73
    %p80 = scmp.eq.s32.totalorder %s11, 1
    %p81 = por %p79, %p80
    %p82 = scmp.ne.s32.totalorder %s74, %s77
    %p83 = scmp.eq.s32.totalorder %s11, 0
    %p84 = por %p82, %p83
    %p85 = scmp.ne.s32.totalorder %s74, %s77
    %p86 = scmp.eq.s32.totalorder %s16, 1
    %p87 = por %p85, %p86
    %p88 = scmp.ne.s32.totalorder %s77, %s78
    %p89 = scmp.eq.s32.totalorder %s16, 0
    %p90 = por %p88, %p89
    %p91 = scmp.ne.s32.totalorder %s77, %s78
    %p92 = scmp.eq.s32.totalorder %s17, 1
    %p93 = por %p91, %p92
    %p95 = scmp.ne.s32.totalorder %s78, %s94
    %p96 = scmp.eq.s32.totalorder %s17, 0
    %p97 = por %p95, %p96
    %s98 = sadd.s32 %s19, %s20
    %s99 = sadd.s32 %s33, %s29
    %s100 = ssub.s32 %s18, %s37
    %s101 = ssub.s32 %s98, %s99
    %s102 = sor.u32 %s100, %s101
    %p103 = scmp.eq.s32.totalorder %s102, 0
    %s105 = sadd.s32 %s104, 1
    %s106 = scalar_select %p103, %s104, %s105
    %p109 = pneg %p103
    %p110 = scmp.eq.s32.totalorder %s11, 1
    %p111 = por %p109, %p110
    %p112 = scmp.ne.s32.totalorder %s104, %s107
    %p113 = scmp.eq.s32.totalorder %s11, 0
    %p114 = por %p112, %p113
    %p115 = scmp.ne.s32.totalorder %s104, %s107
    %p116 = scmp.eq.s32.totalorder %s16, 1
    %p117 = por %p115, %p116
    %p118 = scmp.ne.s32.totalorder %s107, %s108
    %p119 = scmp.eq.s32.totalorder %s16, 0
    %p120 = por %p118, %p119
    %p121 = scmp.ne.s32.totalorder %s107, %s108
    %p122 = scmp.eq.s32.totalorder %s17, 1
    %p123 = por %p121, %p122
    %p125 = scmp.ne.s32.totalorder %s108, %s124
    %p126 = scmp.eq.s32.totalorder %s17, 0
    %p127 = por %p125, %p126
    %s128 = ssub.s32 %s18, %s37
    %s129 = ssub.s32 %s19, %s33
    %s130 = sor.u32 %s128, %s129
    %p131 = scmp.eq.s32.totalorder %s130, 0
    %s133 = sadd.s32 %s132, 1
    %s134 = scalar_select %p131, %s132, %s133
    %p137 = pneg %p131
    %p138 = scmp.eq.s32.totalorder %s11, 1
    %p139 = por %p137, %p138
    %p140 = scmp.ne.s32.totalorder %s132, %s135
    %p141 = scmp.eq.s32.totalorder %s11, 0
    %p142 = por %p140, %p141
    %p143 = scmp.ne.s32.totalorder %s132, %s135
    %p144 = scmp.eq.s32.totalorder %s16, 1
    %p145 = por %p143, %p144
    %p146 = scmp.ne.s32.totalorder %s135, %s136
    %p147 = scmp.eq.s32.totalorder %s16, 0
    %p148 = por %p146, %p147
    %p149 = scmp.ne.s32.totalorder %s135, %s136
    %p150 = scmp.eq.s32.totalorder %s17, 1
    %p151 = por %p149, %p150
    %p153 = scmp.ne.s32.totalorder %s136, %s152
    %p154 = scmp.eq.s32.totalorder %s17, 0
    %p155 = por %p153, %p154
    %s156 = ssub.s32 %s18, %s37
    %s157 = ssub.s32 %s19, %s33
    %s158 = sor.u32 %s156, %s157
    %p159 = scmp.eq.s32.totalorder %s158, 0
    %s161 = sadd.s32 %s160, 1
    %s162 = scalar_select %p159, %s160, %s161
    %p165 = pneg %p159
    %p166 = scmp.eq.s32.totalorder %s11, 1
    %p167 = por %p165, %p166
    %p168 = scmp.ne.s32.totalorder %s160, %s163
    %p169 = scmp.eq.s32.totalorder %s11, 0
    %p170 = por %p168, %p169
    %p171 = scmp.ne.s32.totalorder %s160, %s163
    %p172 = scmp.eq.s32.totalorder %s16, 1
    %p173 = por %p171, %p172
    %p174 = scmp.ne.s32.totalorder %s163, %s164
    %p175 = scmp.eq.s32.totalorder %s16, 0
    %p176 = por %p174, %p175
    %p177 = scmp.ne.s32.totalorder %s163, %s164
    %p178 = scmp.eq.s32.totalorder %s17, 1
    %p179 = por %p177, %p178
    %p181 = scmp.ne.s32.totalorder %s164, %s180
    %p182 = scmp.eq.s32.totalorder %s17, 0
    %p183 = por %p181, %p182
    %p184 = scmp.le.s32.totalorder 1, %s11
    %p185 = scmp.lt.s32.totalorder %s11, 3
    %p186 = pnand %p184, %p185
    %p187 = pneg %p186
    // Predicated region
    $region9: #{cross_entropy_forward.1} parent=5 // pred_check
      _
    $region10: #{cross_entropy_forward.1} parent=5 // pred_check_branch
      %189 = sbr.rel (%p186) target = $region12
    $region11: #{cross_entropy_forward.1} parent=5 // pred_region
      %s190 = ssub.s32 %s11, 1
    $region12: #{cross_entropy_forward.1} parent=5 // pred_fallthru
      _
    %p191 = scmp.lt.s32.totalorder %s11, 2
    // Predicated region
    $region13: #{cross_entropy_forward.1} parent=5 // pred_check
      %p192 = pneg %p191
    $region14: #{cross_entropy_forward.1} parent=5 // pred_check_branch
      %194 = sbr.rel (%p192) target = $region16
    $region15: #{cross_entropy_forward.1} parent=5 // pred_region
      // Predicated region
      $region17: #{cross_entropy_forward.1} parent=15 // pred_check
        %p195 = pneg %p54
      $region18: #{cross_entropy_forward.1} parent=15 // pred_check_branch
        %197 = sbr.rel (%p195) target = $region20
      $region19: #{cross_entropy_forward.1} parent=15 // pred_region
        %s198 = sadd.s32 %s19, %s20
        %p199 = scmp.lt.s32.totalorder %s18, 1
        %s200 = scalar_select %p199, %s18, 1
        %p201 = scmp.lt.s32.totalorder %s198, 0
        %s202 = scalar_select %p201, %s198, 0
        %s203 = smul.addr %s200, 8
        %s204 = sadd.s32 %s202, %s203
        %s205 = smul.addr %s204, 2
        %s206 = scalar_lea.vmem %s0, %s205
        %s207 = sadd.s32 %s19, %s20
      $region20: #{cross_entropy_forward.1} parent=15 // pred_fallthru
        _
      // Predicated region
      $region21: #{cross_entropy_forward.1} parent=15 // pred_check
        %p208 = pneg %p84
      $region22: #{cross_entropy_forward.1} parent=15 // pred_check_branch
        %210 = sbr.rel (%p208) target = $region24
      $region23: #{cross_entropy_forward.1} parent=15 // pred_region
        %s211 = sadd.s32 %s19, %s20
        %p212 = scmp.lt.s32.totalorder %s18, 1
        %s213 = scalar_select %p212, %s18, 1
        %p214 = scmp.lt.s32.totalorder %s211, 0
        %s215 = scalar_select %p214, %s211, 0
        %s216 = smul.addr %s213, 8
        %s217 = sadd.s32 %s215, %s216
        %s218 = smul.addr %s217, 2
        %s219 = scalar_lea.vmem %s1, %s218
        %s220 = sadd.s32 %s19, %s20
      $region24: #{cross_entropy_forward.1} parent=15 // pred_fallthru
        _
      // Predicated region
      $region25: #{cross_entropy_forward.1} parent=15 // pred_check
        %p221 = pneg %p114
      $region26: #{cross_entropy_forward.1} parent=15 // pred_check_branch
        %223 = sbr.rel (%p221) target = $region28
      $region27: #{cross_entropy_forward.1} parent=15 // pred_region
        %s224 = sadd.s32 %s19, %s20
        %p225 = scmp.lt.s32.totalorder %s18, 1
        %s226 = scalar_select %p225, %s18, 1
        %p227 = scmp.lt.s32.totalorder %s224, 0
        %s228 = scalar_select %p227, %s224, 0
        %s229 = sadd.s32 %s228, %s226
        %s230 = smul.addr %s229, 2
        %s231 = scalar_lea.vmem %s2, %s230
        %s232 = sadd.s32 %s19, %s20
      $region28: #{cross_entropy_forward.1} parent=15 // pred_fallthru
        _
    $region16: #{cross_entropy_forward.1} parent=5 // pred_fallthru
      _
    %p233 = scmp.le.s32.totalorder 1, %s11
    %p234 = scmp.lt.s32.totalorder %s11, 3
    %p235 = pnand %p233, %p234
    %p236 = pneg %p235
    // Predicated region
    $region29: #{cross_entropy_forward.1} parent=5 // pred_check
      _
    $region30: #{cross_entropy_forward.1} parent=5 // pred_check_branch
      %238 = sbr.rel (%p235) target = $region32
    $region31: #{cross_entropy_forward.1} parent=5 // pred_region
      %s239 = ssub.s32 %s11, 1
      %s240 = sadd.s32 %s22, %s23
      %p241 = scmp.lt.s32.totalorder %s21, 1
      %s242 = scalar_select %p241, %s21, 1
      %p243 = scmp.lt.s32.totalorder %s240, 0
      %s244 = scalar_select %p243, %s240, 0
      %s245 = smul.addr %s242, 8
      %s246 = sadd.s32 %s244, %s245
      %s247 = smul.addr %s246, 2
      %s248 = scalar_lea.vmem %s0, %s247
      %p249 = pneg %p60
      %p250 = pneg %p57
      %s251 = sadd.s32 %s22, %s23
      %p252 = scmp.lt.s32.totalorder %s21, 1
      %s253 = scalar_select %p252, %s21, 1
      %p254 = scmp.lt.s32.totalorder %s251, 0
      %s255 = scalar_select %p254, %s251, 0
      %s256 = smul.addr %s253, 8
      %s257 = sadd.s32 %s255, %s256
      %s258 = smul.addr %s257, 2
      %s259 = scalar_lea.vmem %s1, %s258
      %p260 = pneg %p90
      %p261 = pneg %p87
      %s262 = sadd.s32 %s22, %s23
      %p263 = scmp.lt.s32.totalorder %s21, 1
      %s264 = scalar_select %p263, %s21, 1
      %p265 = scmp.lt.s32.totalorder %s262, 0
      %s266 = scalar_select %p265, %s262, 0
      %s267 = sadd.s32 %s266, %s264
      %s268 = smul.addr %s267, 2
      %s269 = scalar_lea.vmem %s2, %s268
      %p270 = pneg %p120
      %p271 = pneg %p117
      %p272 = pneg %p148
      %p273 = pneg %p145
      %p274 = scmp.lt.s32.totalorder %s21, 1
      %s275 = scalar_select %p274, %s21, 1
      %p276 = scmp.lt.s32.totalorder %s22, 0
      %s277 = scalar_select %p276, %s22, 0
      %s278 = sadd.s32 %s277, %s275
      %s279 = scalar_lea.vmem %s3, %s278
      %p280 = pneg %p176
      %p281 = pneg %p173
      %p282 = scmp.lt.s32.totalorder %s21, 1
      %s283 = scalar_select %p282, %s21, 1
      %p284 = scmp.lt.s32.totalorder %s22, 0
      %s285 = scalar_select %p284, %s22, 0
      %s286 = sadd.s32 %s285, %s283
      %s287 = scalar_lea.vmem %s4, %s286
      %s288 = sadd.s32 %s22, %s23
      %p289 = scmp.lt.s32.totalorder %s21, 1
      %s290 = scalar_select %p289, %s21, 1
      %p291 = scmp.lt.s32.totalorder %s288, 0
      %s292 = scalar_select %p291, %s288, 0
      %s293 = smul.addr %s290, 8
      %s294 = sadd.s32 %s292, %s293
      %s295 = smul.addr %s294, 2
      %s296 = scalar_lea.vmem %s0, %s295
      %s297 = sadd.s32 %s22, %s23
      %s298 = sadd.s32 %s22, %s23
      %p299 = scmp.lt.s32.totalorder %s21, 1
      %s300 = scalar_select %p299, %s21, 1
      %p301 = scmp.lt.s32.totalorder %s298, 0
      %s302 = scalar_select %p301, %s298, 0
      %s303 = smul.addr %s300, 8
      %s304 = sadd.s32 %s302, %s303
      %s305 = smul.addr %s304, 2
      %s306 = scalar_lea.vmem %s1, %s305
      %s307 = sadd.s32 %s22, %s23
      %s308 = sadd.s32 %s22, %s23
      %p309 = scmp.lt.s32.totalorder %s21, 1
      %s310 = scalar_select %p309, %s21, 1
      %p311 = scmp.lt.s32.totalorder %s308, 0
      %s312 = scalar_select %p311, %s308, 0
      %s313 = sadd.s32 %s312, %s310
      %s314 = smul.addr %s313, 2
      %s315 = scalar_lea.vmem %s2, %s314
      %s316 = sadd.s32 %s22, %s23
      %p317 = scmp.lt.s32.totalorder %s21, 1
      %s318 = scalar_select %p317, %s21, 1
      %p319 = scmp.lt.s32.totalorder %s22, 0
      %s320 = scalar_select %p319, %s22, 0
      %s321 = sadd.s32 %s320, %s318
      %s322 = scalar_lea.vmem %s3, %s321
      %p323 = scmp.lt.s32.totalorder %s21, 1
      %s324 = scalar_select %p323, %s21, 1
      %p325 = scmp.lt.s32.totalorder %s22, 0
      %s326 = scalar_select %p325, %s22, 0
      %s327 = sadd.s32 %s326, %s324
      %s328 = scalar_lea.vmem %s4, %s327
      %p329 = scmp.eq.s32.totalorder %s23, 0
      // Predicated region
      $region33: #{cross_entropy_forward.1} parent=31 // pred_check
        %p330 = pneg %p329
      $region34: #{cross_entropy_forward.1} parent=31 // pred_check_branch
        %332 = sbr.rel (%p330) target = $region36
      $region35: #{cross_entropy_forward.1} parent=31 // pred_region
        %333 = vst [vmem:[#allocation2] sm:$0x3] 0.0
        %334 = vst [vmem:[#allocation3] sm:$0x3] 0.0
      $region36: #{cross_entropy_forward.1} parent=31 // pred_fallthru
        _
      %v335 = vld [vmem:[%s315] sm:$0x3]
      %vm336 = vcmp.ne.s32.totalorder %v335, 4294967295
      %v337 = vld [vmem:[#allocation3] sm:$0x3]
      %v338 = vsel %vm336, 1, 0
      %v339 = vcvt.s32.f32 %v338
      %v340 = vadd.f32 %v337, %v339
      %341 = vst [vmem:[#allocation3] sm:$0x3] %v340
      %vm342 = vcmp.eq.s32.totalorder %v335, 0
      %vm343 = vcmp.eq.s32.totalorder %v335, 1
      %vm344 = vcmp.eq.s32.totalorder %v335, 2
      %vm345 = vcmp.eq.s32.totalorder %v335, 3
      %vm346 = vcmp.eq.s32.totalorder %v335, 4
      %vm347 = vcmp.eq.s32.totalorder %v335, 5
      %vm348 = vcmp.eq.s32.totalorder %v335, 6
      %vm349 = vcmp.eq.s32.totalorder %v335, 7
      %v350 = vld [vmem:[%s296] sm:$0x3]
      %v351 = vld [vmem:[%s296 + $0x2] sm:$0x3]
      %v352 = vld [vmem:[%s296 + $0x4] sm:$0x3]
      %v353 = vld [vmem:[%s296 + $0x6] sm:$0x3]
      %v354 = vld [vmem:[%s296 + $0x8] sm:$0x3]
      %v355 = vld [vmem:[%s296 + $0xa] sm:$0x3]
      %v356 = vld [vmem:[%s296 + $0xc] sm:$0x3]
      %v357 = vld [vmem:[%s296 + $0xe] sm:$0x3]
      %vm358 = vcmask 1041408
      %v359 = vsel %vm358, %v350, -inf
      %v360 = vsel %vm358, %v351, -inf
      %v361 = vsel %vm358, %v352, -inf
      %v362 = vsel %vm358, %v353, -inf
      %v363 = vsel %vm358, %v354, -inf
      %v364 = vmax.f32 %v359, %v363
      %v365 = vsel %vm358, %v355, -inf
      %v366 = vmax.f32 %v360, %v365
      %v367 = vsel %vm358, %v356, -inf
      %v368 = vmax.f32 %v361, %v367
      %v369 = vsel %vm358, %v357, -inf
      %v370 = vmax.f32 %v362, %v369
      %v371 = vmax.f32 %v364, %v366
      %v372 = vmax.f32 %v368, %v370
      %v373 = vmax.f32 %v371, %v372
      %v374 = vsub.f32 %v350, %v373
      %v375 = vsub.f32 %v351, %v373
      %v376 = vsub.f32 %v352, %v373
      %v377 = vsub.f32 %v353, %v373
      %v378 = vsub.f32 %v354, %v373
      %v379 = vsub.f32 %v355, %v373
      %v380 = vsub.f32 %v356, %v373
      %v381 = vsub.f32 %v357, %v373
      %v382 = vmul.f32 %v374, 1.442695
      %v383 = vpow.pop %v382
      %v384 = vmul.f32 %v375, 1.442695
      %v385 = vpow.pop %v384
      %v386 = vmul.f32 %v376, 1.442695
      %v387 = vpow.pop %v386
      %v388 = vmul.f32 %v377, 1.442695
      %v389 = vpow.pop %v388
      %v390 = vmul.f32 %v378, 1.442695
      %v391 = vpow.pop %v390
      %v392 = vmul.f32 %v379, 1.442695
      %v393 = vpow.pop %v392
      %v394 = vmul.f32 %v380, 1.442695
      %v395 = vpow.pop %v394
      %v396 = vmul.f32 %v381, 1.442695
      %v397 = vpow.pop %v396
      %v398 = vsel %vm358, %v383, 0.0
      %v399 = vsel %vm358, %v385, 0.0
      %v400 = vadd.f32 %v398, %v399
      %v401 = vsel %vm358, %v387, 0.0
      %v402 = vadd.f32 %v400, %v401
      %v403 = vsel %vm358, %v389, 0.0
      %v404 = vadd.f32 %v402, %v403
      %v405 = vsel %vm358, %v391, 0.0
      %v406 = vadd.f32 %v404, %v405
      %v407 = vsel %vm358, %v393, 0.0
      %v408 = vadd.f32 %v406, %v407
      %v409 = vsel %vm358, %v395, 0.0
      %v410 = vadd.f32 %v408, %v409
      %v411 = vsel %vm358, %v397, 0.0
      %v412 = vadd.f32 %v410, %v411
      %v413 = vlog2.pop %v412
      %v414 = vmul.f32 %v413, 0.6931472
      %v415 = vadd.f32 %v373, %v414
      %v416 = vsel %vm342, %v350, 0.0
      %v417 = vsel %vm343, %v351, 0.0
      %v418 = vsel %vm344, %v352, 0.0
      %v419 = vsel %vm345, %v353, 0.0
      %v420 = vsel %vm346, %v354, 0.0
      %v421 = vsel %vm347, %v355, 0.0
      %v422 = vsel %vm348, %v356, 0.0
      %v423 = vsel %vm349, %v357, 0.0
      %v424 = vsel %vm358, %v416, 0.0
      %v425 = vsel %vm358, %v417, 0.0
      %v426 = vadd.f32 %v424, %v425
      %v427 = vsel %vm358, %v418, 0.0
      %v428 = vadd.f32 %v426, %v427
      %v429 = vsel %vm358, %v419, 0.0
      %v430 = vadd.f32 %v428, %v429
      %v431 = vsel %vm358, %v420, 0.0
      %v432 = vadd.f32 %v430, %v431
      %v433 = vsel %vm358, %v421, 0.0
      %v434 = vadd.f32 %v432, %v433
      %v435 = vsel %vm358, %v422, 0.0
      %v436 = vadd.f32 %v434, %v435
      %v437 = vsel %vm358, %v423, 0.0
      %v438 = vadd.f32 %v436, %v437
      %v439 = vsub.f32 %v415, %v438
      %v440 = vmul.f32 %v439, 0.4
      %v441 = vadd.f32 %v440, 0.0
      %v442 = vld [vmem:[%s306] sm:$0x3]
      %v443 = vld [vmem:[%s306 + $0x2] sm:$0x3]
      %v444 = vld [vmem:[%s306 + $0x4] sm:$0x3]
      %v445 = vld [vmem:[%s306 + $0x6] sm:$0x3]
      %v446 = vld [vmem:[%s306 + $0x8] sm:$0x3]
      %v447 = vld [vmem:[%s306 + $0xa] sm:$0x3]
      %v448 = vld [vmem:[%s306 + $0xc] sm:$0x3]
      %v449 = vld [vmem:[%s306 + $0xe] sm:$0x3]
      %v450 = vsel %vm358, %v442, -inf
      %v451 = vsel %vm358, %v443, -inf
      %v452 = vsel %vm358, %v444, -inf
      %v453 = vsel %vm358, %v445, -inf
      %v454 = vsel %vm358, %v446, -inf
      %v455 = vmax.f32 %v450, %v454
      %v456 = vsel %vm358, %v447, -inf
      %v457 = vmax.f32 %v451, %v456
      %v458 = vsel %vm358, %v448, -inf
      %v459 = vmax.f32 %v452, %v458
      %v460 = vsel %vm358, %v449, -inf
      %v461 = vmax.f32 %v453, %v460
      %v462 = vmax.f32 %v455, %v457
      %v463 = vmax.f32 %v459, %v461
      %v464 = vmax.f32 %v462, %v463
      %v465 = vsub.f32 %v442, %v464
      %v466 = vsub.f32 %v443, %v464
      %v467 = vsub.f32 %v444, %v464
      %v468 = vsub.f32 %v445, %v464
      %v469 = vsub.f32 %v446, %v464
      %v470 = vsub.f32 %v447, %v464
      %v471 = vsub.f32 %v448, %v464
      %v472 = vsub.f32 %v449, %v464
      %v473 = vmul.f32 %v465, 1.442695
      %v474 = vpow.pop %v473
      %v475 = vmul.f32 %v466, 1.442695
      %v476 = vpow.pop %v475
      %v477 = vmul.f32 %v467, 1.442695
      %v478 = vpow.pop %v477
      %v479 = vmul.f32 %v468, 1.442695
      %v480 = vpow.pop %v479
      %v481 = vmul.f32 %v469, 1.442695
      %v482 = vpow.pop %v481
      %v483 = vmul.f32 %v470, 1.442695
      %v484 = vpow.pop %v483
      %v485 = vmul.f32 %v471, 1.442695
      %v486 = vpow.pop %v485
      %v487 = vmul.f32 %v472, 1.442695
      %v488 = vpow.pop %v487
      %v489 = vsel %vm358, %v474, 0.0
      %v490 = vsel %vm358, %v476, 0.0
      %v491 = vadd.f32 %v489, %v490
      %v492 = vsel %vm358, %v478, 0.0
      %v493 = vadd.f32 %v491, %v492
      %v494 = vsel %vm358, %v480, 0.0
      %v495 = vadd.f32 %v493, %v494
      %v496 = vsel %vm358, %v482, 0.0
      %v497 = vadd.f32 %v495, %v496
      %v498 = vsel %vm358, %v484, 0.0
      %v499 = vadd.f32 %v497, %v498
      %v500 = vsel %vm358, %v486, 0.0
      %v501 = vadd.f32 %v499, %v500
      %v502 = vsel %vm358, %v488, 0.0
      %v503 = vadd.f32 %v501, %v502
      %v504 = vlog2.pop %v503
      %v505 = vmul.f32 %v504, 0.6931472
      %v506 = vadd.f32 %v464, %v505
      %v507 = vsel %vm342, %v442, 0.0
      %v508 = vsel %vm343, %v443, 0.0
      %v509 = vsel %vm344, %v444, 0.0
      %v510 = vsel %vm345, %v445, 0.0
      %v511 = vsel %vm346, %v446, 0.0
      %v512 = vsel %vm347, %v447, 0.0
      %v513 = vsel %vm348, %v448, 0.0
      %v514 = vsel %vm349, %v449, 0.0
      %v515 = vsel %vm358, %v507, 0.0
      %v516 = vsel %vm358, %v508, 0.0
      %v517 = vadd.f32 %v515, %v516
      %v518 = vsel %vm358, %v509, 0.0
      %v519 = vadd.f32 %v517, %v518
      %v520 = vsel %vm358, %v510, 0.0
      %v521 = vadd.f32 %v519, %v520
      %v522 = vsel %vm358, %v511, 0.0
      %v523 = vadd.f32 %v521, %v522
      %v524 = vsel %vm358, %v512, 0.0
      %v525 = vadd.f32 %v523, %v524
      %v526 = vsel %vm358, %v513, 0.0
      %v527 = vadd.f32 %v525, %v526
      %v528 = vsel %vm358, %v514, 0.0
      %v529 = vadd.f32 %v527, %v528
      %v530 = vsub.f32 %v506, %v529
      %v531 = vadd.f32 %v441, %v530
      %v532 = vld [vmem:[#allocation2] sm:$0x3]
      %v533 = vsel %vm336, %v531, 0.0
      %v534 = vadd.f32 %v532, %v533
      %535 = vst [vmem:[#allocation2] sm:$0x3] %v534
      // Predicated region
      $region37: #{cross_entropy_forward.1} parent=31 // pred_check
        %p536 = pneg %p329
      $region38: #{cross_entropy_forward.1} parent=31 // pred_check_branch
        %538 = sbr.rel (%p536) target = $region40
      $region39: #{cross_entropy_forward.1} parent=31 // pred_region
        %v539 = vld [vmem:[#allocation2] sm:$0x3]
        %v540 = vsel %vm358, %v539, 0.0
        %541 = vadd.xlane.f32.xlu0 %v540
        %v542 = vpop.xlane.xlu0 %541
        %v543 = vrot.slane %v542, 4
        %v544 = vadd.f32 %v542, %v543
        %v545 = vrot.slane %v544, 2
        %v546 = vadd.f32 %v544, %v545
        %v547 = vrot.slane %v546, 1
        %v548 = vadd.f32 %v546, %v547
        %s549 = vtos %v548
        %v550 = vstv %s549
        %vm551 = vcmask 0
        %552 = vst.msk [vmem:[%s322] sm:$0x1] %vm551, %v550
        %v553 = vld [vmem:[#allocation3] sm:$0x3]
        %v554 = vsel %vm358, %v553, 0.0
        %555 = vadd.xlane.f32.xlu0 %v554
        %v556 = vpop.xlane.xlu0 %555
        %v557 = vrot.slane %v556, 4
        %v558 = vadd.f32 %v556, %v557
        %v559 = vrot.slane %v558, 2
        %v560 = vadd.f32 %v558, %v559
        %v561 = vrot.slane %v560, 1
        %v562 = vadd.f32 %v560, %v561
        %s563 = vtos %v562
        %v564 = vstv %s563
        %565 = vst.msk [vmem:[%s328] sm:$0x1] %vm551, %v564
      $region40: #{cross_entropy_forward.1} parent=31 // pred_fallthru
        _
      %p566 = scmp.lt.s32.totalorder %s21, 1
      %s567 = scalar_select %p566, %s21, 1
      %p568 = scmp.lt.s32.totalorder %s22, 0
      %s569 = scalar_select %p568, %s22, 0
      %s570 = sadd.s32 %s569, %s567
      %s571 = scalar_lea.vmem %s3, %s570
      %p572 = scmp.lt.s32.totalorder %s21, 1
      %s573 = scalar_select %p572, %s21, 1
      %p574 = scmp.lt.s32.totalorder %s22, 0
      %s575 = scalar_select %p574, %s22, 0
      %s576 = sadd.s32 %s575, %s573
      %s577 = scalar_lea.vmem %s4, %s576
      // Predicated region
      $region41: #{cross_entropy_forward.1} parent=31 // pred_check
        %p578 = pneg %p145
      $region42: #{cross_entropy_forward.1} parent=31 // pred_check_branch
        %580 = sbr.rel (%p578) target = $region44
      $region43: #{cross_entropy_forward.1} parent=31 // pred_region
        _
      $region44: #{cross_entropy_forward.1} parent=31 // pred_fallthru
        _
      // Predicated region
      $region45: #{cross_entropy_forward.1} parent=31 // pred_check
        %p581 = pneg %p173
      $region46: #{cross_entropy_forward.1} parent=31 // pred_check_branch
        %583 = sbr.rel (%p581) target = $region48
      $region47: #{cross_entropy_forward.1} parent=31 // pred_region
        _
      $region48: #{cross_entropy_forward.1} parent=31 // pred_fallthru
        _
    $region32: #{cross_entropy_forward.1} parent=5 // pred_fallthru
      _
    %p584 = scmp.le.s32.totalorder 2, %s11
    // Predicated region
    $region49: #{cross_entropy_forward.1} parent=5 // pred_check
      %p585 = pneg %p584
    $region50: #{cross_entropy_forward.1} parent=5 // pred_check_branch
      %587 = sbr.rel (%p585) target = $region52
    $region51: #{cross_entropy_forward.1} parent=5 // pred_region
      %s588 = ssub.s32 %s11, 2
      // Predicated region
      $region53: #{cross_entropy_forward.1} parent=51 // pred_check
        %p589 = pneg %p151
      $region54: #{cross_entropy_forward.1} parent=51 // pred_check_branch
        %591 = sbr.rel (%p589) target = $region56
      $region55: #{cross_entropy_forward.1} parent=51 // pred_region
        %p592 = scmp.lt.s32.totalorder %s24, 1
        %s593 = scalar_select %p592, %s24, 1
        %p594 = scmp.lt.s32.totalorder %s25, 0
        %s595 = scalar_select %p594, %s25, 0
        %s596 = sadd.s32 %s595, %s593
        %s597 = scalar_lea.vmem %s3, %s596
      $region56: #{cross_entropy_forward.1} parent=51 // pred_fallthru
        _
      // Predicated region
      $region57: #{cross_entropy_forward.1} parent=51 // pred_check
        %p598 = pneg %p179
      $region58: #{cross_entropy_forward.1} parent=51 // pred_check_branch
        %600 = sbr.rel (%p598) target = $region60
      $region59: #{cross_entropy_forward.1} parent=51 // pred_region
        %p601 = scmp.lt.s32.totalorder %s24, 1
        %s602 = scalar_select %p601, %s24, 1
        %p603 = scmp.lt.s32.totalorder %s25, 0
        %s604 = scalar_select %p603, %s25, 0
        %s605 = sadd.s32 %s604, %s602
        %s606 = scalar_lea.vmem %s4, %s605
      $region60: #{cross_entropy_forward.1} parent=51 // pred_fallthru
        _
    $region52: #{cross_entropy_forward.1} parent=5 // pred_fallthru
      _
  $region6: #{cross_entropy_forward.1} parent=0 // loop_footer
    %s15 = sadd.s32 1, %s11
  $region7: #{cross_entropy_forward.1} parent=0 // loop_footer_branch
    %10 = sbr.rel target = $region3
  $region8: #{cross_entropy_forward.1} parent=0 // loop_exit
    _

</llo_original>
